<compile_context>
chip_gen: v6e
topology: v6e:2x2x1
jax: 0.10.0
libtpu: 0.0.40
codegen_flags: <defaults>
</compile_context>

<pallas_src>
import math
import numpy as np
import jax
import jax.numpy as jnp
from jax.experimental import pallas as pl
from jax.experimental.pallas import tpu as pltpu


def _round_up(x, m):
    return ((x + m - 1) // m) * m


def _sublane_align(dtype):
    # f32 -> 8 rows per sublane tile, bf16 -> 16, int8/fp8 -> 32.
    return max(8, 32 // jnp.dtype(dtype).itemsize)


def _vmem_capacity_bytes():
    cap = 64 * 1024 * 1024  # conservative default: v7x per-TC VMEM
    try:
        info = pltpu.get_tpu_info()
        cap = int(getattr(info, "vmem_capacity_bytes", cap))
    except Exception:
        pass
    return cap


def _build_layout(mlps, mlps2, align):
    """Sublane-aligned layout of the concat scratch: pieces [x0, y0, x1, y1, x2, ...]."""
    L = len(mlps)
    piece_w = [mlps2[0]]
    for j in range(L - 1):
        piece_w += [mlps[j], mlps2[j + 1]]
    offs, gaps, off = [], [], 0
    for w in piece_w:
        offs.append(off)
        pw = _round_up(w, align)
        if pw != w:
            gaps.append((off + w, pw - w))      # rows that must hold zeros
        off += pw
    x_offs = [offs[2 * j] for j in range(L)]
    y_offs = [offs[2 * j + 1] for j in range(L - 1)]
    # Contraction depth for layer i = padded width of its concat input (prefix up to x_i).
    ks = [offs[2 * i] + _round_up(piece_w[2 * i], align) for i in range(L)]
    return dict(piece_w=piece_w, offs=offs, gaps=gaps, c_pad=off,
                x_offs=x_offs, y_offs=y_offs, ks=ks)


def _pack_params(weights, biases, mlps, layout, align, mx_dtype):
    """Zero-pad weight columns to the scratch offsets and pack all layers into one array.
    Biases are packed separately (kept f32)."""
    L = len(weights)
    offs, piece_w, ks = layout["offs"], layout["piece_w"], layout["ks"]

    wr_offs, r = [], 0
    for co in mlps:
        wr_offs.append(r)
        r += _round_up(co, align)
    wpack = np.zeros((r, ks[-1]), dtype=np.float32)
    for i, w in enumerate(weights):
        w = np.asarray(w, dtype=np.float32)
        src = 0
        for p in range(1 + 2 * i):                       # pieces of layer i's concat input
            pw = piece_w[p]
            wpack[wr_offs[i]:wr_offs[i] + w.shape[0], offs[p]:offs[p] + pw] = w[:, src:src + pw]
            src += pw
        assert src == w.shape[1], (src, w.shape)

    br_offs, br = [], 0
    for co in mlps:
        br_offs.append(br)
        br += _round_up(co, 8)
    bpack = np.zeros((br, 1), dtype=np.float32)
    for i, b in enumerate(biases):
        bpack[br_offs[i]:br_offs[i] + mlps[i], 0] = np.asarray(b, dtype=np.float32)

    return (jnp.asarray(wpack, dtype=mx_dtype), jnp.asarray(bpack, dtype=jnp.float32),
            wr_offs, br_offs)


def _make_kernel(mlps, mlps2, layout, wr_offs, br_offs):
    L = len(mlps)
    x_offs, y_offs, ks, gaps = layout["x_offs"], layout["y_offs"], layout["ks"], layout["gaps"]

    def kernel(*refs):
        x_refs = refs[:L]
        w_ref, b_ref, o_ref, cat_ref = refs[L], refs[L + 1], refs[L + 2], refs[L + 3]
        cat_dt = cat_ref.dtype
        lanes = cat_ref.shape[-1]

        # Zero the tiny sublane-alignment gaps (every step -> megacore-safe) so the
        # zero-padded weight columns only ever multiply zeros, never stale VMEM.
        for g0, gsz in gaps:
            cat_ref[g0:g0 + gsz, :] = jnp.zeros((gsz, lanes), cat_dt)

        # Stage the raw inputs at their aligned offsets in the concat scratch.
        for j in range(L):
            cat_ref[x_offs[j]:x_offs[j] + mlps2[j], :] = x_refs[j][...].astype(cat_dt)

        # One MXU matmul per layer against the growing concat prefix; bias + ReLU in f32.
        y = None
        for i in range(L):
            w_i = w_ref[wr_offs[i]:wr_offs[i] + mlps[i], 0:ks[i]]
            acc = jnp.dot(w_i, cat_ref[0:ks[i], :], preferred_element_type=jnp.float32)
            b_i = b_ref[br_offs[i]:br_offs[i] + mlps[i], :]
            y = jnp.maximum(acc + b_i, 0.0)
            if i < L - 1:
                cat_ref[y_offs[i]:y_offs[i] + mlps[i], :] = y.astype(cat_dt)
        o_ref[...] = y.astype(o_ref.dtype)

    return kernel


def _choose_tile_n(N, B, bytes_per_col, budget):
    """Pad-free tile over N: a multiple of 128 dividing N, or N itself.  Prefer >=2 total
    grid steps (keeps both v7x TensorCores busy), then the biggest tile that fits VMEM."""
    cands = [N] + [t for t in range(128, N, 128) if N % t == 0]
    fitting = [t for t in cands if t * bytes_per_col <= budget]
    if fitting:
        multi = [t for t in fitting if B * (N // t) >= 2]
        return max(multi if multi else fitting), 0
    # Rare fallback (no pad-free tile fits VMEM): pad N up to a 128-aligned tile.
    t = max(128, (budget // bytes_per_col) // 128 * 128)
    return t, _round_up(N, t) - N


def multi_dense_mlp_1d(xs, weights, biases):
    """xs[i]: [B, C_i, N] (NCL, like PyTorch).  weights[i]: [c_out_i, c_in_i]; biases[i]: [c_out_i].
    Returns the last layer's output, [B, mlps[-1], N]."""
    L = len(weights)
    assert len(xs) == L and len(biases) == L
    B, _, N = xs[0].shape
    mlps = [int(w.shape[0]) for w in weights]
    mlps2 = [int(x.shape[1]) for x in xs]
    dtype = xs[0].dtype
    itemsize = jnp.dtype(dtype).itemsize
    align = _sublane_align(dtype)

    layout = _build_layout(mlps, mlps2, align)
    wpack, bpack, wr_offs, br_offs = _pack_params(weights, biases, mlps, layout, align, dtype)

    cap = _vmem_capacity_bytes()
    # Per-lane VMEM footprint: double-buffered inputs + output, single-buffered concat scratch.
    bytes_per_col = (2 * sum(mlps2) + 2 * mlps[-1]) * itemsize + layout["c_pad"] * itemsize
    budget = int(cap * 0.45)
    tile, pad_n = _choose_tile_n(N, B, bytes_per_col, budget)
    if pad_n:  # rare fallback only
        xs = [jnp.pad(x, ((0, 0), (0, 0), (0, pad_n))) for x in xs]
    Np = N + pad_n
    grid = (B, Np // tile)

    in_specs = []
    for x in xs:
        c = x.shape[1]
        in_specs.append(pl.BlockSpec((None, c, tile), lambda b, n: (b, 0, n)))
    in_specs.append(pl.BlockSpec(wpack.shape, lambda b, n: (0, 0)))   # VMEM-resident weights
    in_specs.append(pl.BlockSpec(bpack.shape, lambda b, n: (0, 0)))   # VMEM-resident biases

    out = pl.pallas_call(
        _make_kernel(mlps, mlps2, layout, wr_offs, br_offs),
        out_shape=jax.ShapeDtypeStruct((B, mlps[-1], Np), dtype),
        grid_spec=pltpu.PrefetchScalarGridSpec(
            num_scalar_prefetch=0,
            grid=grid,
            in_specs=in_specs,
            out_specs=pl.BlockSpec((None, mlps[-1], tile), lambda b, n: (b, 0, n)),
            scratch_shapes=[pltpu.VMEM((layout["c_pad"], tile), dtype)],
        ),
        compiler_params=pltpu.CompilerParams(
            dimension_semantics=("parallel", "parallel"),
            vmem_limit_bytes=min(int(cap * 0.75), 96 * 1024 * 1024),
        ),
    )(*xs, wpack, bpack)

    if pad_n:
        out = out[:, :, :N]
    return out


def init_params(mlps, mlps2, key):
    """Deterministic parameter init matching __init__:
    conv weight: kaiming_normal_ (fan_in = c_in * k = c_in, relu gain sqrt(2)); bias: 0."""
    weights, biases = [], []
    c_in = mlps2[0]
    for i, c_out in enumerate(mlps):
        key, sub = jax.random.split(key)
        std = math.sqrt(2.0 / c_in)
        weights.append(std * jax.random.normal(sub, (c_out, c_in), dtype=jnp.float32))
        biases.append(jnp.zeros((c_out,), dtype=jnp.float32))
        if i < len(mlps) - 1:
            c_in = c_in + c_out + mlps2[i + 1]
    return weights, biases


def _reference(xs, weights, biases):
    """Plain-JAX reference of the PyTorch forward for a sanity check."""
    pc = xs[0]
    y = None
    for i in range(len(weights)):
        W, b = weights[i], biases[i]
        y = jnp.maximum(jnp.einsum("oc,bcn->bon", W, pc) + b[None, :, None], 0.0)
        if i < len(weights) - 1:
            pc = jnp.concatenate([pc, y, xs[i + 1]], axis=1)
    return y


if __name__ == "__main__":
    # Small config consistent with the module: mlps (out channels), mlps2 (extra-input channels).
    mlps = [16, 16, 32]
    mlps2 = [4, 8, 6]
    B, N = 2, 16

    key = jax.random.PRNGKey(0)
    key, k0, k1, k2 = jax.random.split(key, 4)
    xs = [
        jax.random.normal(k0, (B, mlps2[0], N), dtype=jnp.float32),
        jax.random.normal(k1, (B, mlps2[1], N), dtype=jnp.float32),
        jax.random.normal(k2, (B, mlps2[2], N), dtype=jnp.float32),
    ]

    weights, biases = init_params(mlps, mlps2, jax.random.PRNGKey(42))

    out = multi_dense_mlp_1d(xs, weights, biases)
    out = jax.block_until_ready(out)

    ref = _reference(xs, weights, biases)
    assert out.shape == (B, mlps[-1], N), out.shape
    assert jnp.allclose(out, ref, atol=1e-4, rtol=1e-4), "mismatch vs reference"

    print("KERNEL_OK")
</pallas_src>

<mosaic_0001>
module attributes {stable_mosaic.version = 11 : i64} {
  func.func @kernel(%arg0: i32, %arg1: i32, %arg2: memref<1x4x16xf32, #tpu.memory_space<vmem>>, %arg3: memref<1x8x16xf32, #tpu.memory_space<vmem>>, %arg4: memref<1x6x16xf32, #tpu.memory_space<vmem>>, %arg5: memref<64x56xf32, #tpu.memory_space<vmem>>, %arg6: memref<64x1xf32, #tpu.memory_space<vmem>>, %arg7: memref<1x32x16xf32, #tpu.memory_space<vmem>>, %arg8: memref<56x16xf32, #tpu.memory_space<vmem>>) attributes {dimension_semantics = [#tpu.dimension_semantics<parallel>, #tpu.dimension_semantics<parallel>], iteration_bounds = array<i64: 2, 1>, scalar_prefetch = 0 : i64, scratch_operands = 1 : i64, tpu.core_type = #tpu.core_type<tc>, window_params = [{transform_indices = @transform_0, window_bounds = array<i64: 1, 4, 16>}, {transform_indices = @transform_1, window_bounds = array<i64: 1, 8, 16>}, {transform_indices = @transform_2, window_bounds = array<i64: 1, 6, 16>}, {pipeline_mode = #tpu.pipeline_mode<synchronous>, transform_indices = @transform_3, window_bounds = array<i64: 64, 56>}, {pipeline_mode = #tpu.pipeline_mode<synchronous>, transform_indices = @transform_4, window_bounds = array<i64: 64, 1>}, {transform_indices = @transform_5, window_bounds = array<i64: 1, 32, 16>}]} {
    %cst = arith.constant 0.000000e+00 : f32
    %0 = vector.broadcast %cst : f32 to vector<4x16xf32>
    %c4 = arith.constant 4 : index
    %c0 = arith.constant 0 : index
    %1 = vector.load %arg8[%c4, %c0] : memref<56x16xf32, #tpu.memory_space<vmem>>, vector<4x16xf32>
    tpu.vector_store %arg8[%c4, %c0], %0 {strides = array<i32>} : memref<56x16xf32, #tpu.memory_space<vmem>>, vector<4x16xf32>,
    %cst_0 = arith.constant 0.000000e+00 : f32
    %2 = vector.broadcast %cst_0 : f32 to vector<2x16xf32>
    %c54 = arith.constant 54 : index
    %c0_1 = arith.constant 0 : index
    %3 = vector.load %arg8[%c54, %c0_1] : memref<56x16xf32, #tpu.memory_space<vmem>>, vector<2x16xf32>
    tpu.vector_store %arg8[%c54, %c0_1], %2 {strides = array<i32>} : memref<56x16xf32, #tpu.memory_space<vmem>>, vector<2x16xf32>,
    %c0_2 = arith.constant 0 : index
    %c0_3 = arith.constant 0 : index
    %c0_4 = arith.constant 0 : index
    %4 = vector.load %arg2[%c0_2, %c0_3, %c0_4] : memref<1x4x16xf32, #tpu.memory_space<vmem>>, vector<1x4x16xf32>
    %5 = vector.shape_cast %4 : vector<1x4x16xf32> to vector<4x16xf32>
    %c0_5 = arith.constant 0 : index
    %c0_6 = arith.constant 0 : index
    %6 = vector.load %arg8[%c0_5, %c0_6] : memref<56x16xf32, #tpu.memory_space<vmem>>, vector<4x16xf32>
    tpu.vector_store %arg8[%c0_5, %c0_6], %5 {strides = array<i32>} : memref<56x16xf32, #tpu.memory_space<vmem>>, vector<4x16xf32>,
    %c0_7 = arith.constant 0 : index
    %c0_8 = arith.constant 0 : index
    %c0_9 = arith.constant 0 : index
    %7 = vector.load %arg3[%c0_7, %c0_8, %c0_9] : memref<1x8x16xf32, #tpu.memory_space<vmem>>, vector<1x8x16xf32>
    %8 = vector.shape_cast %7 : vector<1x8x16xf32> to vector<8x16xf32>
    %c24 = arith.constant 24 : index
    %c0_10 = arith.constant 0 : index
    %9 = vector.load %arg8[%c24, %c0_10] : memref<56x16xf32, #tpu.memory_space<vmem>>, vector<8x16xf32>
    tpu.vector_store %arg8[%c24, %c0_10], %8 {strides = array<i32>} : memref<56x16xf32, #tpu.memory_space<vmem>>, vector<8x16xf32>,
    %c0_11 = arith.constant 0 : index
    %c0_12 = arith.constant 0 : index
    %c0_13 = arith.constant 0 : index
    %10 = vector.load %arg4[%c0_11, %c0_12, %c0_13] : memref<1x6x16xf32, #tpu.memory_space<vmem>>, vector<1x6x16xf32>
    %11 = vector.shape_cast %10 : vector<1x6x16xf32> to vector<6x16xf32>
    %c48 = arith.constant 48 : index
    %c0_14 = arith.constant 0 : index
    %12 = vector.load %arg8[%c48, %c0_14] : memref<56x16xf32, #tpu.memory_space<vmem>>, vector<6x16xf32>
    tpu.vector_store %arg8[%c48, %c0_14], %11 {strides = array<i32>} : memref<56x16xf32, #tpu.memory_space<vmem>>, vector<6x16xf32>,
    %c0_15 = arith.constant 0 : index
    %c0_16 = arith.constant 0 : index
    %13 = vector.load %arg5[%c0_15, %c0_16] : memref<64x56xf32, #tpu.memory_space<vmem>>, vector<16x8xf32>
    %c0_17 = arith.constant 0 : index
    %c0_18 = arith.constant 0 : index
    %14 = vector.load %arg8[%c0_17, %c0_18] : memref<56x16xf32, #tpu.memory_space<vmem>>, vector<8x16xf32>
    %cst_19 = arith.constant dense<0.000000e+00> : vector<16x16xf32>
    %15 = tpu.matmul %13, %14, %cst_19 {dimension_numbers = #tpu.dot_dimension_numbers<[1], [0], [0], [1], [0, 0, 1, 1], [], []>} : vector<16x8xf32>, vector<8x16xf32>, vector<16x16xf32> -> vector<16x16xf32>
    %c0_20 = arith.constant 0 : index
    %c0_21 = arith.constant 0 : index
    %16 = vector.load %arg6[%c0_20, %c0_21] : memref<64x1xf32, #tpu.memory_space<vmem>>, vector<16x1xf32>
    %17 = vector.broadcast %16 : vector<16x1xf32> to vector<16x16xf32>
    %18 = arith.addf %15, %17 : vector<16x16xf32>
    %cst_22 = arith.constant 0.000000e+00 : f32
    %19 = vector.broadcast %cst_22 : f32 to vector<16x16xf32>
    %20 = arith.maximumf %18, %19 : vector<16x16xf32>
    %c8 = arith.constant 8 : index
    %c0_23 = arith.constant 0 : index
    %21 = vector.load %arg8[%c8, %c0_23] : memref<56x16xf32, #tpu.memory_space<vmem>>, vector<16x16xf32>
    tpu.vector_store %arg8[%c8, %c0_23], %20 {strides = array<i32>} : memref<56x16xf32, #tpu.memory_space<vmem>>, vector<16x16xf32>,
    %c16 = arith.constant 16 : index
    %c0_24 = arith.constant 0 : index
    %22 = vector.load %arg5[%c16, %c0_24] : memref<64x56xf32, #tpu.memory_space<vmem>>, vector<16x32xf32>
    %c0_25 = arith.constant 0 : index
    %c0_26 = arith.constant 0 : index
    %23 = vector.load %arg8[%c0_25, %c0_26] : memref<56x16xf32, #tpu.memory_space<vmem>>, vector<32x16xf32>
    %cst_27 = arith.constant dense<0.000000e+00> : vector<16x16xf32>
    %24 = tpu.matmul %22, %23, %cst_27 {dimension_numbers = #tpu.dot_dimension_numbers<[1], [0], [0], [1], [0, 0, 1, 1], [], []>} : vector<16x32xf32>, vector<32x16xf32>, vector<16x16xf32> -> vector<16x16xf32>
    %c16_28 = arith.constant 16 : index
    %c0_29 = arith.constant 0 : index
    %25 = vector.load %arg6[%c16_28, %c0_29] : memref<64x1xf32, #tpu.memory_space<vmem>>, vector<16x1xf32>
    %26 = vector.broadcast %25 : vector<16x1xf32> to vector<16x16xf32>
    %27 = arith.addf %24, %26 : vector<16x16xf32>
    %cst_30 = arith.constant 0.000000e+00 : f32
    %28 = vector.broadcast %cst_30 : f32 to vector<16x16xf32>
    %29 = arith.maximumf %27, %28 : vector<16x16xf32>
    %c32 = arith.constant 32 : index
    %c0_31 = arith.constant 0 : index
    %30 = vector.load %arg8[%c32, %c0_31] : memref<56x16xf32, #tpu.memory_space<vmem>>, vector<16x16xf32>
    tpu.vector_store %arg8[%c32, %c0_31], %29 {strides = array<i32>} : memref<56x16xf32, #tpu.memory_space<vmem>>, vector<16x16xf32>,
    %c32_32 = arith.constant 32 : index
    %c0_33 = arith.constant 0 : index
    %31 = vector.load %arg5[%c32_32, %c0_33] : memref<64x56xf32, #tpu.memory_space<vmem>>, vector<32x56xf32>
    %c0_34 = arith.constant 0 : index
    %c0_35 = arith.constant 0 : index
    %32 = vector.load %arg8[%c0_34, %c0_35] : memref<56x16xf32, #tpu.memory_space<vmem>>, vector<56x16xf32>
    %cst_36 = arith.constant dense<0.000000e+00> : vector<32x16xf32>
    %33 = tpu.matmul %31, %32, %cst_36 {dimension_numbers = #tpu.dot_dimension_numbers<[1], [0], [0], [1], [0, 0, 1, 1], [], []>} : vector<32x56xf32>, vector<56x16xf32>, vector<32x16xf32> -> vector<32x16xf32>
    %c32_37 = arith.constant 32 : index
    %c0_38 = arith.constant 0 : index
    %34 = vector.load %arg6[%c32_37, %c0_38] : memref<64x1xf32, #tpu.memory_space<vmem>>, vector<32x1xf32>
    %35 = vector.broadcast %34 : vector<32x1xf32> to vector<32x16xf32>
    %36 = arith.addf %33, %35 : vector<32x16xf32>
    %cst_39 = arith.constant 0.000000e+00 : f32
    %37 = vector.broadcast %cst_39 : f32 to vector<32x16xf32>
    %38 = arith.maximumf %36, %37 : vector<32x16xf32>
    %c0_40 = arith.constant 0 : index
    %c0_41 = arith.constant 0 : index
    %c0_42 = arith.constant 0 : index
    %39 = vector.load %arg7[%c0_40, %c0_41, %c0_42] : memref<1x32x16xf32, #tpu.memory_space<vmem>>, vector<1x32x16xf32>
    %40 = vector.shape_cast %39 : vector<1x32x16xf32> to vector<32x16xf32>
    %41 = vector.shape_cast %38 : vector<32x16xf32> to vector<1x32x16xf32>
    tpu.vector_store %arg7[%c0_40, %c0_41, %c0_42], %41 {strides = array<i32>} : memref<1x32x16xf32, #tpu.memory_space<vmem>>, vector<1x32x16xf32>,
    return
  }
  func.func @transform_0(%arg0: i32, %arg1: i32) -> (i32, i32, i32) {
    %c0_i32 = arith.constant 0 : i32
    %c0_i32_0 = arith.constant 0 : i32
    return %arg0, %c0_i32, %arg1 : i32, i32, i32
  }
  func.func @transform_1(%arg0: i32, %arg1: i32) -> (i32, i32, i32) {
    %c0_i32 = arith.constant 0 : i32
    %c0_i32_0 = arith.constant 0 : i32
    return %arg0, %c0_i32, %arg1 : i32, i32, i32
  }
  func.func @transform_2(%arg0: i32, %arg1: i32) -> (i32, i32, i32) {
    %c0_i32 = arith.constant 0 : i32
    %c0_i32_0 = arith.constant 0 : i32
    return %arg0, %c0_i32, %arg1 : i32, i32, i32
  }
  func.func @transform_3(%arg0: i32, %arg1: i32) -> (i32, i32) {
    %c0_i32 = arith.constant 0 : i32
    %c0_i32_0 = arith.constant 0 : i32
    %c0_i32_1 = arith.constant 0 : i32
    return %c0_i32, %c0_i32_0 : i32, i32
  }
  func.func @transform_4(%arg0: i32, %arg1: i32) -> (i32, i32) {
    %c0_i32 = arith.constant 0 : i32
    %c0_i32_0 = arith.constant 0 : i32
    %c0_i32_1 = arith.constant 0 : i32
    return %c0_i32, %c0_i32_0 : i32, i32
  }
  func.func @transform_5(%arg0: i32, %arg1: i32) -> (i32, i32, i32) {
    %c0_i32 = arith.constant 0 : i32
    %c0_i32_0 = arith.constant 0 : i32
    return %arg0, %c0_i32, %arg1 : i32, i32, i32
  }
}

</mosaic_0001>

<llo_original>
// kernel: tpu_custom_call.1
$region0: #{tpu_custom_call.1}
  #allocation0 [shape = 'u32[]', space=smem, size = 0x4, offset = 0x4, fixed_abs, tag = 'smem constant byte address 0x4 - core index']
  #allocation1 [shape = 'u32[144,128]{1,0:T(1,128)}', space=vmem, size = 0x12000, scoped, tag = 'internal scratch']
  #allocation2 [shape = 'f32[56,16]{1,0:T(8,128)}', space=vmem, size = 0x7000, scoped, tag = 'scratch operand']
  %s0 = inlined_call_operand.vmem [shape: f32[2,4,16], index: 0, kind: input, shape index: {}]
  %s1 = inlined_call_operand.vmem [shape: f32[2,8,16], index: 1, kind: input, shape index: {}]
  %s2 = inlined_call_operand.vmem [shape: f32[2,6,16], index: 2, kind: input, shape index: {}]
  %s3 = inlined_call_operand.vmem [shape: f32[64,56], index: 3, kind: input, shape index: {}]
  %s4 = inlined_call_operand.vmem [shape: f32[64,1], index: 4, kind: input, shape index: {}]
  %s5 = inlined_call_operand.vmem [shape: f32[2,32,16], index: 5, kind: output, shape index: {}]
  %s6 = sld [smem:[#allocation0]]
  $region53: #{tpu_custom_call.1} parent=0
    _
  %s8 = ssub.s32 1, %s6
  %s9 = scalar_select 0, %s8, %s6
  loop: start=0, step=1, limit=4
  $region2: #{tpu_custom_call.1} parent=0 // loop_pre_header
    _
  $region3: #{tpu_custom_call.1} parent=0 // loop_header
    %s11 = sphi 0, %s15
    %p12 = scmp.ge.s32.totalorder %s11, 4
    %s18 = sphi 0, %s30
    %s19 = sphi 0, %s26
    %s20 = sphi 0, %s18
    %s21 = sphi 0, %s19
    %s22 = sphi 0, %s20
    %s23 = sphi 0, %s21
    %s35 = sphi 0, %s37
    %s38 = sphi 0, %s35
    %s39 = sphi 0, %s38
    %s55 = sphi 0, %s39
    %s63 = sphi 0, %s65
    %s66 = sphi 0, %s63
    %s67 = sphi 0, %s66
    %s83 = sphi 0, %s67
    %s91 = sphi 0, %s93
    %s94 = sphi 0, %s91
    %s95 = sphi 0, %s94
    %s111 = sphi 0, %s95
    %s115 = sphi 0, %s115
    %s117 = sphi 0, %s115
    %s118 = sphi 0, %s117
    %s132 = sphi 0, %s118
    %s136 = sphi 0, %s136
    %s138 = sphi 0, %s136
    %s139 = sphi 0, %s138
    %s153 = sphi 0, %s139
    %s161 = sphi 0, %s163
    %s164 = sphi 0, %s161
    %s165 = sphi 0, %s164
    %s181 = sphi 0, %s165
  $region4: #{tpu_custom_call.1} parent=0 // loop_header_branch
    %14 = sbr.rel (%p12) target = $region8
  $region5: #{tpu_custom_call.1} parent=0 // loop_body
    %s16 = ssub.s32 %s11, 1
    %s17 = ssub.s32 %s11, 2
    %s24 = sadd.s32 1, %s19
    %p25 = scmp.ge.s32.totalorder %s24, 1
    %s26 = scalar_select %p25, 0, %s24
    %s27 = sadd.s32 1, %s18
    %s28 = scalar_select %p25, %s27, %s18
    %p29 = scmp.ge.s32.totalorder %s28, 2
    %s30 = scalar_select %p29, 0, %s28
    %s31 = ssub.s32 %s18, %s30
    %s32 = ssub.s32 %s19, %s26
    %s33 = sor.u32 %s31, %s32
    %p34 = scmp.eq.s32.totalorder %s33, 0
    %s36 = sadd.s32 %s35, 1
    %s37 = scalar_select %p34, %s35, %s36
    %p40 = pneg %p34
    %p41 = scmp.eq.s32.totalorder %s11, 1
    %p42 = por %p40, %p41
    %p43 = scmp.ne.s32.totalorder %s35, %s38
    %p44 = scmp.eq.s32.totalorder %s11, 0
    %p45 = por %p43, %p44
    %p46 = scmp.ne.s32.totalorder %s35, %s38
    %p47 = scmp.eq.s32.totalorder %s16, 1
    %p48 = por %p46, %p47
    %p49 = scmp.ne.s32.totalorder %s38, %s39
    %p50 = scmp.eq.s32.totalorder %s16, 0
    %p51 = por %p49, %p50
    %p52 = scmp.ne.s32.totalorder %s38, %s39
    %p53 = scmp.eq.s32.totalorder %s17, 1
    %p54 = por %p52, %p53
    %p56 = scmp.ne.s32.totalorder %s39, %s55
    %p57 = scmp.eq.s32.totalorder %s17, 0
    %p58 = por %p56, %p57
    %s59 = ssub.s32 %s18, %s30
    %s60 = ssub.s32 %s19, %s26
    %s61 = sor.u32 %s59, %s60
    %p62 = scmp.eq.s32.totalorder %s61, 0
    %s64 = sadd.s32 %s63, 1
    %s65 = scalar_select %p62, %s63, %s64
    %p68 = pneg %p62
    %p69 = scmp.eq.s32.totalorder %s11, 1
    %p70 = por %p68, %p69
    %p71 = scmp.ne.s32.totalorder %s63, %s66
    %p72 = scmp.eq.s32.totalorder %s11, 0
    %p73 = por %p71, %p72
    %p74 = scmp.ne.s32.totalorder %s63, %s66
    %p75 = scmp.eq.s32.totalorder %s16, 1
    %p76 = por %p74, %p75
    %p77 = scmp.ne.s32.totalorder %s66, %s67
    %p78 = scmp.eq.s32.totalorder %s16, 0
    %p79 = por %p77, %p78
    %p80 = scmp.ne.s32.totalorder %s66, %s67
    %p81 = scmp.eq.s32.totalorder %s17, 1
    %p82 = por %p80, %p81
    %p84 = scmp.ne.s32.totalorder %s67, %s83
    %p85 = scmp.eq.s32.totalorder %s17, 0
    %p86 = por %p84, %p85
    %s87 = ssub.s32 %s18, %s30
    %s88 = ssub.s32 %s19, %s26
    %s89 = sor.u32 %s87, %s88
    %p90 = scmp.eq.s32.totalorder %s89, 0
    %s92 = sadd.s32 %s91, 1
    %s93 = scalar_select %p90, %s91, %s92
    %p96 = pneg %p90
    %p97 = scmp.eq.s32.totalorder %s11, 1
    %p98 = por %p96, %p97
    %p99 = scmp.ne.s32.totalorder %s91, %s94
    %p100 = scmp.eq.s32.totalorder %s11, 0
    %p101 = por %p99, %p100
    %p102 = scmp.ne.s32.totalorder %s91, %s94
    %p103 = scmp.eq.s32.totalorder %s16, 1
    %p104 = por %p102, %p103
    %p105 = scmp.ne.s32.totalorder %s94, %s95
    %p106 = scmp.eq.s32.totalorder %s16, 0
    %p107 = por %p105, %p106
    %p108 = scmp.ne.s32.totalorder %s94, %s95
    %p109 = scmp.eq.s32.totalorder %s17, 1
    %p110 = por %p108, %p109
    %p112 = scmp.ne.s32.totalorder %s95, %s111
    %p113 = scmp.eq.s32.totalorder %s17, 0
    %p114 = por %p112, %p113
    %s116 = sadd.s32 %s115, 1
    %p119 = scmp.eq.s32.totalorder %s11, 1
    %p120 = scmp.ne.s32.totalorder %s115, %s117
    %p121 = scmp.eq.s32.totalorder %s11, 0
    %p122 = por %p120, %p121
    %p123 = scmp.ne.s32.totalorder %s115, %s117
    %p124 = scmp.eq.s32.totalorder %s16, 1
    %p125 = por %p123, %p124
    %p126 = scmp.ne.s32.totalorder %s117, %s118
    %p127 = scmp.eq.s32.totalorder %s16, 0
    %p128 = por %p126, %p127
    %p129 = scmp.ne.s32.totalorder %s117, %s118
    %p130 = scmp.eq.s32.totalorder %s17, 1
    %p131 = por %p129, %p130
    %p133 = scmp.ne.s32.totalorder %s118, %s132
    %p134 = scmp.eq.s32.totalorder %s17, 0
    %p135 = por %p133, %p134
    %s137 = sadd.s32 %s136, 1
    %p140 = scmp.eq.s32.totalorder %s11, 1
    %p141 = scmp.ne.s32.totalorder %s136, %s138
    %p142 = scmp.eq.s32.totalorder %s11, 0
    %p143 = por %p141, %p142
    %p144 = scmp.ne.s32.totalorder %s136, %s138
    %p145 = scmp.eq.s32.totalorder %s16, 1
    %p146 = por %p144, %p145
    %p147 = scmp.ne.s32.totalorder %s138, %s139
    %p148 = scmp.eq.s32.totalorder %s16, 0
    %p149 = por %p147, %p148
    %p150 = scmp.ne.s32.totalorder %s138, %s139
    %p151 = scmp.eq.s32.totalorder %s17, 1
    %p152 = por %p150, %p151
    %p154 = scmp.ne.s32.totalorder %s139, %s153
    %p155 = scmp.eq.s32.totalorder %s17, 0
    %p156 = por %p154, %p155
    %s157 = ssub.s32 %s18, %s30
    %s158 = ssub.s32 %s19, %s26
    %s159 = sor.u32 %s157, %s158
    %p160 = scmp.eq.s32.totalorder %s159, 0
    %s162 = sadd.s32 %s161, 1
    %s163 = scalar_select %p160, %s161, %s162
    %p166 = pneg %p160
    %p167 = scmp.eq.s32.totalorder %s11, 1
    %p168 = por %p166, %p167
    %p169 = scmp.ne.s32.totalorder %s161, %s164
    %p170 = scmp.eq.s32.totalorder %s11, 0
    %p171 = por %p169, %p170
    %p172 = scmp.ne.s32.totalorder %s161, %s164
    %p173 = scmp.eq.s32.totalorder %s16, 1
    %p174 = por %p172, %p173
    %p175 = scmp.ne.s32.totalorder %s164, %s165
    %p176 = scmp.eq.s32.totalorder %s16, 0
    %p177 = por %p175, %p176
    %p178 = scmp.ne.s32.totalorder %s164, %s165
    %p179 = scmp.eq.s32.totalorder %s17, 1
    %p180 = por %p178, %p179
    %p182 = scmp.ne.s32.totalorder %s165, %s181
    %p183 = scmp.eq.s32.totalorder %s17, 0
    %p184 = por %p182, %p183
    %p185 = scmp.le.s32.totalorder 1, %s11
    %p186 = scmp.lt.s32.totalorder %s11, 3
    %p187 = pnand %p185, %p186
    %p188 = pneg %p187
    // Predicated region
    $region9: #{tpu_custom_call.1} parent=5 // pred_check
      _
    $region10: #{tpu_custom_call.1} parent=5 // pred_check_branch
      %190 = sbr.rel (%p187) target = $region12
    $region11: #{tpu_custom_call.1} parent=5 // pred_region
      %s191 = ssub.s32 %s11, 1
      // Predicated region
      $region13: #{tpu_custom_call.1} parent=11 // pred_check
        %p192 = pneg %p128
      $region14: #{tpu_custom_call.1} parent=11 // pred_check_branch
        %194 = sbr.rel (%p192) target = $region16
      $region15: #{tpu_custom_call.1} parent=11 // pred_region
        _
      $region16: #{tpu_custom_call.1} parent=11 // pred_fallthru
        _
      // Predicated region
      $region17: #{tpu_custom_call.1} parent=11 // pred_check
        %p195 = pneg %p149
      $region18: #{tpu_custom_call.1} parent=11 // pred_check_branch
        %197 = sbr.rel (%p195) target = $region20
      $region19: #{tpu_custom_call.1} parent=11 // pred_region
        _
      $region20: #{tpu_custom_call.1} parent=11 // pred_fallthru
        _
    $region12: #{tpu_custom_call.1} parent=5 // pred_fallthru
      _
    %p198 = scmp.lt.s32.totalorder %s11, 2
    // Predicated region
    $region21: #{tpu_custom_call.1} parent=5 // pred_check
      %p199 = pneg %p198
    $region22: #{tpu_custom_call.1} parent=5 // pred_check_branch
      %201 = sbr.rel (%p199) target = $region24
    $region23: #{tpu_custom_call.1} parent=5 // pred_region
      // Predicated region
      $region25: #{tpu_custom_call.1} parent=23 // pred_check
        %p202 = pneg %p45
      $region26: #{tpu_custom_call.1} parent=23 // pred_check_branch
        %204 = sbr.rel (%p202) target = $region28
      $region27: #{tpu_custom_call.1} parent=23 // pred_region
        %p205 = scmp.lt.s32.totalorder %s18, 1
        %s206 = scalar_select %p205, %s18, 1
        %p207 = scmp.lt.s32.totalorder %s19, 0
        %s208 = scalar_select %p207, %s19, 0
        %s209 = sadd.s32 %s208, %s206
        %s210 = smul.addr %s209, 4
        %s211 = scalar_lea.vmem %s0, %s210
      $region28: #{tpu_custom_call.1} parent=23 // pred_fallthru
        _
      // Predicated region
      $region29: #{tpu_custom_call.1} parent=23 // pred_check
        %p212 = pneg %p73
      $region30: #{tpu_custom_call.1} parent=23 // pred_check_branch
        %214 = sbr.rel (%p212) target = $region32
      $region31: #{tpu_custom_call.1} parent=23 // pred_region
        %p215 = scmp.lt.s32.totalorder %s18, 1
        %s216 = scalar_select %p215, %s18, 1
        %p217 = scmp.lt.s32.totalorder %s19, 0
        %s218 = scalar_select %p217, %s19, 0
        %s219 = sadd.s32 %s218, %s216
        %s220 = smul.addr %s219, 8
        %s221 = scalar_lea.vmem %s1, %s220
      $region32: #{tpu_custom_call.1} parent=23 // pred_fallthru
        _
      // Predicated region
      $region33: #{tpu_custom_call.1} parent=23 // pred_check
        %p222 = pneg %p101
      $region34: #{tpu_custom_call.1} parent=23 // pred_check_branch
        %224 = sbr.rel (%p222) target = $region36
      $region35: #{tpu_custom_call.1} parent=23 // pred_region
        %p225 = scmp.lt.s32.totalorder %s18, 1
        %s226 = scalar_select %p225, %s18, 1
        %p227 = scmp.lt.s32.totalorder %s19, 0
        %s228 = scalar_select %p227, %s19, 0
        %s229 = sadd.s32 %s228, %s226
        %s230 = smul.addr %s229, 8
        %s231 = scalar_lea.vmem %s2, %s230
      $region36: #{tpu_custom_call.1} parent=23 // pred_fallthru
        _
    $region24: #{tpu_custom_call.1} parent=5 // pred_fallthru
      _
    %p232 = scmp.le.s32.totalorder 1, %s11
    %p233 = scmp.lt.s32.totalorder %s11, 3
    %p234 = pnand %p232, %p233
    %p235 = pneg %p234
    // Predicated region
    $region37: #{tpu_custom_call.1} parent=5 // pred_check
      _
    $region38: #{tpu_custom_call.1} parent=5 // pred_check_branch
      %237 = sbr.rel (%p234) target = $region40
    $region39: #{tpu_custom_call.1} parent=5 // pred_region
      %s238 = ssub.s32 %s11, 1
      %p239 = scmp.lt.s32.totalorder %s20, 1
      %s240 = scalar_select %p239, %s20, 1
      %p241 = scmp.lt.s32.totalorder %s21, 0
      %s242 = scalar_select %p241, %s21, 0
      %s243 = sadd.s32 %s242, %s240
      %s244 = smul.addr %s243, 4
      %s245 = scalar_lea.vmem %s0, %s244
      %p246 = pneg %p51
      %p247 = pneg %p48
      %p248 = scmp.lt.s32.totalorder %s20, 1
      %s249 = scalar_select %p248, %s20, 1
      %p250 = scmp.lt.s32.totalorder %s21, 0
      %s251 = scalar_select %p250, %s21, 0
      %s252 = sadd.s32 %s251, %s249
      %s253 = smul.addr %s252, 8
      %s254 = scalar_lea.vmem %s1, %s253
      %p255 = pneg %p79
      %p256 = pneg %p76
      %p257 = scmp.lt.s32.totalorder %s20, 1
      %s258 = scalar_select %p257, %s20, 1
      %p259 = scmp.lt.s32.totalorder %s21, 0
      %s260 = scalar_select %p259, %s21, 0
      %s261 = sadd.s32 %s260, %s258
      %s262 = smul.addr %s261, 8
      %s263 = scalar_lea.vmem %s2, %s262
      %p264 = pneg %p107
      %p265 = pneg %p104
      %p266 = pneg %p128
      %p267 = pneg %p125
      %p268 = pneg %p149
      %p269 = pneg %p146
      %p270 = pneg %p177
      %p271 = pneg %p174
      %p272 = scmp.lt.s32.totalorder %s20, 1
      %s273 = scalar_select %p272, %s20, 1
      %p274 = scmp.lt.s32.totalorder %s21, 0
      %s275 = scalar_select %p274, %s21, 0
      %s276 = smul.addr %s273, 4
      %s277 = sadd.s32 %s275, %s276
      %s278 = smul.addr %s277, 8
      %s279 = scalar_lea.vmem %s5, %s278
      %p280 = scmp.lt.s32.totalorder %s20, 1
      %s281 = scalar_select %p280, %s20, 1
      %p282 = scmp.lt.s32.totalorder %s21, 0
      %s283 = scalar_select %p282, %s21, 0
      %s284 = sadd.s32 %s283, %s281
      %s285 = smul.addr %s284, 4
      %s286 = scalar_lea.vmem %s0, %s285
      %p287 = scmp.lt.s32.totalorder %s20, 1
      %s288 = scalar_select %p287, %s20, 1
      %p289 = scmp.lt.s32.totalorder %s21, 0
      %s290 = scalar_select %p289, %s21, 0
      %s291 = sadd.s32 %s290, %s288
      %s292 = smul.addr %s291, 8
      %s293 = scalar_lea.vmem %s1, %s292
      %p294 = scmp.lt.s32.totalorder %s20, 1
      %s295 = scalar_select %p294, %s20, 1
      %p296 = scmp.lt.s32.totalorder %s21, 0
      %s297 = scalar_select %p296, %s21, 0
      %s298 = sadd.s32 %s297, %s295
      %s299 = smul.addr %s298, 8
      %s300 = scalar_lea.vmem %s2, %s299
      %p301 = scmp.lt.s32.totalorder %s20, 1
      %s302 = scalar_select %p301, %s20, 1
      %p303 = scmp.lt.s32.totalorder %s21, 0
      %s304 = scalar_select %p303, %s21, 0
      %s305 = smul.addr %s302, 4
      %s306 = sadd.s32 %s304, %s305
      %s307 = smul.addr %s306, 8
      %s308 = scalar_lea.vmem %s5, %s307
      %vm309 = vcmask 125952
      %310 = vst.msk [vmem:[#allocation2 + $0x4] sm:$0xf] %vm309, 0.0
      %vm311 = vcmask 123904
      %312 = vst.msk [vmem:[#allocation2 + $0x36] sm:$0x3] %vm311, 0.0
      %v313 = vld [vmem:[%s286] sm:$0xf]
      %314 = vst.msk [vmem:[#allocation2] sm:$0xf] %vm309, %v313
      %v315 = vld [vmem:[%s293] sm:$0xff]
      %vm316 = vcmask 130048
      %317 = vst.msk [vmem:[#allocation2 + $0x18] sm:$0xff] %vm316, %v315
      %v318 = vld [vmem:[%s300] sm:$0x3f]
      %vm319 = vcmask 128000
      %320 = vst.msk [vmem:[#allocation2 + $0x30] sm:$0x3f] %vm319, %v318
      %v321 = vld [vmem:[%s3] sm:$0xff]
      %v322 = vld [vmem:[%s3 + $0x8] sm:$0xff]
      %v323 = vld [vmem:[#allocation2] sm:$0xff]
      %v324 = vld [vmem:[%s4] sm:$0xff]
      %v325 = vld [vmem:[%s4 + $0x8] sm:$0xff]
      %327 = vset.pattern.permute.xlu0 0
      %328 = vperm.xlu0 %327, %v324
      %v329 = vpop.permute.xlu0 %328
      %332 = vset.pattern.permute.xlu0 0
      %333 = vperm.xlu0 %332, %v325
      %v334 = vpop.permute.xlu0 %333
      %vm336 = vcmask 64512
      %v338 = vsel %vm336, %v321, 0
      %v341 = vsel %vm336, %v322, 0
      %343 = vmatprep.subr.mxu0 0.0
      %344 = vmatpush1.msra.mxu0 0.0
      %345 = vmatprep.subr.mxu0 0.0
      %346 = vmatpush1.msra.mxu0 0.0
      %347 = vmatprep.subr.mxu0 0.0
      %348 = vmatpush1.msra.mxu0 0.0
      %349 = vmatprep.subr.mxu0 0.0
      %350 = vmatpush1.msra.mxu0 0.0
      %351 = vmatprep.subr.mxu0 0.0
      %352 = vmatpush1.msra.mxu0 0.0
      %353 = vmatprep.subr.mxu0 0.0
      %354 = vmatpush1.msra.mxu0 0.0
      %355 = vmatprep.subr.mxu0 0.0
      %356 = vmatpush1.msra.mxu0 0.0
      %357 = vmatprep.subr.mxu0 0.0
      %358 = vmatpush1.msra.mxu0 0.0
      %359 = vmatprep.subr.mxu0 0.0
      %360 = vmatpush1.msra.mxu0 0.0
      %361 = vmatprep.subr.mxu0 0.0
      %362 = vmatpush1.msra.mxu0 0.0
      %363 = vmatprep.subr.mxu0 0.0
      %364 = vmatpush1.msra.mxu0 0.0
      %365 = vmatprep.subr.mxu0 0.0
      %366 = vmatpush1.msra.mxu0 0.0
      %367 = vmatprep.subr.mxu0 0.0
      %368 = vmatpush1.msra.mxu0 0.0
      %369 = vmatprep.subr.mxu0 0.0
      %370 = vmatpush1.msra.mxu0 0.0
      %371 = vmatprep.subr.mxu0 0.0
      %372 = vmatpush1.msra.mxu0 0.0
      %373 = vmatprep.subr.mxu0 0.0
      %374 = vmatpush1.msra.mxu0 %v323
      %375 = vmatprep.subr.mxu0 0.0
      %376 = vmatpush2.msra.mxu0 0.0
      %377 = vmatprep.subr.mxu0 0.0
      %378 = vmatpush2.msra.mxu0 0.0
      %379 = vmatprep.subr.mxu0 0.0
      %380 = vmatpush2.msra.mxu0 0.0
      %381 = vmatprep.subr.mxu0 0.0
      %382 = vmatpush2.msra.mxu0 0.0
      %383 = vmatprep.subr.mxu0 0.0
      %384 = vmatpush2.msra.mxu0 0.0
      %385 = vmatprep.subr.mxu0 0.0
      %386 = vmatpush2.msra.mxu0 0.0
      %387 = vmatprep.subr.mxu0 0.0
      %388 = vmatpush2.msra.mxu0 0.0
      %389 = vmatprep.subr.mxu0 0.0
      %390 = vmatpush2.msra.mxu0 0.0
      %391 = vmatprep.subr.mxu0 0.0
      %392 = vmatpush2.msra.mxu0 0.0
      %393 = vmatprep.subr.mxu0 0.0
      %394 = vmatpush2.msra.mxu0 0.0
      %395 = vmatprep.subr.mxu0 0.0
      %396 = vmatpush2.msra.mxu0 0.0
      %397 = vmatprep.subr.mxu0 0.0
      %398 = vmatpush2.msra.mxu0 0.0
      %399 = vmatprep.subr.mxu0 0.0
      %400 = vmatpush2.msra.mxu0 0.0
      %401 = vmatprep.subr.mxu0 0.0
      %402 = vmatpush2.msra.mxu0 0.0
      %403 = vmatprep.subr.mxu0 0.0
      %404 = vmatpush2.msra.mxu0 0.0
      %405 = vmatprep.subr.mxu0 0.0
      %406 = vmatpush2.msra.mxu0 0.0
      %407 = vmatprep.mubr.f32.mxu0 0.0
      %408 = vmatmul.mubr.f32.gmra.mxu0 %v338
      %v409 = vpop.f32.mrf.mxu0
      %v410 = vadd.f32 %v329, %v409
      %v411 = vpop.f32.mrf.mxu0
      %412 = vmatprep.mubr.f32.mxu0 0.0
      %413 = vmatmul.mubr.f32.gmra.mxu0 %v341
      %v414 = vpop.f32.mrf.mxu0
      %v415 = vadd.f32 %v334, %v414
      %v416 = vpop.f32.mrf.mxu0
      %417 = vdwg.mxu0
      %v418 = vmax.f32 %v410, 0.0
      %v419 = vmax.f32 %v415, 0.0
      %420 = vst.msk [vmem:[#allocation2 + $0x8] sm:$0xff] %vm316, %v418
      %421 = vst.msk [vmem:[#allocation2 + $0x10] sm:$0xff] %vm316, %v419
      %v422 = vld [vmem:[%s3 + $0x10] sm:$0xff]
      %v423 = vld [vmem:[%s3 + $0x18] sm:$0xff]
      %v424 = vld [vmem:[#allocation2] sm:$0xff]
      %v425 = vld [vmem:[#allocation2 + $0x8] sm:$0xff]
      %v426 = vld [vmem:[#allocation2 + $0x10] sm:$0xff]
      %v427 = vld [vmem:[#allocation2 + $0x18] sm:$0xff]
      %v428 = vld [vmem:[%s4 + $0x10] sm:$0xff]
      %v429 = vld [vmem:[%s4 + $0x18] sm:$0xff]
      %431 = vset.pattern.permute.xlu0 0
      %432 = vperm.xlu0 %431, %v428
      %v433 = vpop.permute.xlu0 %432
      %436 = vset.pattern.permute.xlu0 0
      %437 = vperm.xlu0 %436, %v429
      %v438 = vpop.permute.xlu0 %437
      %vm440 = vcmask 261120
      %v442 = vsel %vm440, %v422, 0
      %v445 = vsel %vm440, %v423, 0
      %447 = vmatprep.subr.mxu0 0.0
      %448 = vmatpush1.msra.mxu0 0.0
      %449 = vmatprep.subr.mxu0 0.0
      %450 = vmatpush1.msra.mxu0 0.0
      %451 = vmatprep.subr.mxu0 0.0
      %452 = vmatpush1.msra.mxu0 0.0
      %453 = vmatprep.subr.mxu0 0.0
      %454 = vmatpush1.msra.mxu0 0.0
      %455 = vmatprep.subr.mxu0 0.0
      %456 = vmatpush1.msra.mxu0 0.0
      %457 = vmatprep.subr.mxu0 0.0
      %458 = vmatpush1.msra.mxu0 0.0
      %459 = vmatprep.subr.mxu0 0.0
      %460 = vmatpush1.msra.mxu0 0.0
      %461 = vmatprep.subr.mxu0 0.0
      %462 = vmatpush1.msra.mxu0 0.0
      %463 = vmatprep.subr.mxu0 0.0
      %464 = vmatpush1.msra.mxu0 0.0
      %465 = vmatprep.subr.mxu0 0.0
      %466 = vmatpush1.msra.mxu0 0.0
      %467 = vmatprep.subr.mxu0 0.0
      %468 = vmatpush1.msra.mxu0 0.0
      %469 = vmatprep.subr.mxu0 0.0
      %470 = vmatpush1.msra.mxu0 0.0
      %471 = vmatprep.subr.mxu0 0.0
      %472 = vmatpush1.msra.mxu0 %v427
      %473 = vmatprep.subr.mxu0 0.0
      %474 = vmatpush1.msra.mxu0 %v426
      %475 = vmatprep.subr.mxu0 0.0
      %476 = vmatpush1.msra.mxu0 %v425
      %477 = vmatprep.subr.mxu0 0.0
      %478 = vmatpush1.msra.mxu0 %v424
      %479 = vmatprep.subr.mxu0 0.0
      %480 = vmatpush2.msra.mxu0 0.0
      %481 = vmatprep.subr.mxu0 0.0
      %482 = vmatpush2.msra.mxu0 0.0
      %483 = vmatprep.subr.mxu0 0.0
      %484 = vmatpush2.msra.mxu0 0.0
      %485 = vmatprep.subr.mxu0 0.0
      %486 = vmatpush2.msra.mxu0 0.0
      %487 = vmatprep.subr.mxu0 0.0
      %488 = vmatpush2.msra.mxu0 0.0
      %489 = vmatprep.subr.mxu0 0.0
      %490 = vmatpush2.msra.mxu0 0.0
      %491 = vmatprep.subr.mxu0 0.0
      %492 = vmatpush2.msra.mxu0 0.0
      %493 = vmatprep.subr.mxu0 0.0
      %494 = vmatpush2.msra.mxu0 0.0
      %495 = vmatprep.subr.mxu0 0.0
      %496 = vmatpush2.msra.mxu0 0.0
      %497 = vmatprep.subr.mxu0 0.0
      %498 = vmatpush2.msra.mxu0 0.0
      %499 = vmatprep.subr.mxu0 0.0
      %500 = vmatpush2.msra.mxu0 0.0
      %501 = vmatprep.subr.mxu0 0.0
      %502 = vmatpush2.msra.mxu0 0.0
      %503 = vmatprep.subr.mxu0 0.0
      %504 = vmatpush2.msra.mxu0 0.0
      %505 = vmatprep.subr.mxu0 0.0
      %506 = vmatpush2.msra.mxu0 0.0
      %507 = vmatprep.subr.mxu0 0.0
      %508 = vmatpush2.msra.mxu0 0.0
      %509 = vmatprep.subr.mxu0 0.0
      %510 = vmatpush2.msra.mxu0 0.0
      %511 = vmatprep.mubr.f32.mxu0 0.0
      %512 = vmatmul.mubr.f32.gmra.mxu0 %v442
      %v513 = vpop.f32.mrf.mxu0
      %v514 = vadd.f32 %v433, %v513
      %v515 = vpop.f32.mrf.mxu0
      %516 = vmatprep.mubr.f32.mxu0 0.0
      %517 = vmatmul.mubr.f32.gmra.mxu0 %v445
      %v518 = vpop.f32.mrf.mxu0
      %v519 = vadd.f32 %v438, %v518
      %v520 = vpop.f32.mrf.mxu0
      %521 = vdwg.mxu0
      %v522 = vmax.f32 %v514, 0.0
      %v523 = vmax.f32 %v519, 0.0
      %524 = vst.msk [vmem:[#allocation2 + $0x20] sm:$0xff] %vm316, %v522
      %525 = vst.msk [vmem:[#allocation2 + $0x28] sm:$0xff] %vm316, %v523
      %v526 = vld [vmem:[%s3 + $0x20] sm:$0xff]
      %v527 = vld [vmem:[%s3 + $0x28] sm:$0xff]
      %v528 = vld [vmem:[%s3 + $0x30] sm:$0xff]
      %v529 = vld [vmem:[%s3 + $0x38] sm:$0xff]
      %v530 = vld [vmem:[#allocation2] sm:$0xff]
      %v531 = vld [vmem:[#allocation2 + $0x8] sm:$0xff]
      %v532 = vld [vmem:[#allocation2 + $0x10] sm:$0xff]
      %v533 = vld [vmem:[#allocation2 + $0x18] sm:$0xff]
      %v534 = vld [vmem:[#allocation2 + $0x20] sm:$0xff]
      %v535 = vld [vmem:[#allocation2 + $0x28] sm:$0xff]
      %v536 = vld [vmem:[#allocation2 + $0x30] sm:$0xff]
      %v537 = vld [vmem:[%s4 + $0x20] sm:$0xff]
      %v538 = vld [vmem:[%s4 + $0x28] sm:$0xff]
      %v539 = vld [vmem:[%s4 + $0x30] sm:$0xff]
      %v540 = vld [vmem:[%s4 + $0x38] sm:$0xff]
      %542 = vset.pattern.permute.xlu0 0
      %543 = vperm.xlu0 %542, %v537
      %v544 = vpop.permute.xlu0 %543
      %547 = vset.pattern.permute.xlu0 0
      %548 = vperm.xlu0 %547, %v538
      %v549 = vpop.permute.xlu0 %548
      %552 = vset.pattern.permute.xlu0 0
      %553 = vperm.xlu0 %552, %v539
      %v554 = vpop.permute.xlu0 %553
      %557 = vset.pattern.permute.xlu0 0
      %558 = vperm.xlu0 %557, %v540
      %v559 = vpop.permute.xlu0 %558
      %vm561 = vcmask 457728
      %v563 = vsel %vm561, %v526, 0
      %v566 = vsel %vm561, %v527, 0
      %v569 = vsel %vm561, %v528, 0
      %v572 = vsel %vm561, %v529, 0
      %574 = vmatprep.subr.mxu0 0.0
      %575 = vmatpush1.msra.mxu0 0.0
      %576 = vmatprep.subr.mxu0 0.0
      %577 = vmatpush1.msra.mxu0 0.0
      %578 = vmatprep.subr.mxu0 0.0
      %579 = vmatpush1.msra.mxu0 0.0
      %580 = vmatprep.subr.mxu0 0.0
      %581 = vmatpush1.msra.mxu0 0.0
      %582 = vmatprep.subr.mxu0 0.0
      %583 = vmatpush1.msra.mxu0 0.0
      %584 = vmatprep.subr.mxu0 0.0
      %585 = vmatpush1.msra.mxu0 0.0
      %586 = vmatprep.subr.mxu0 0.0
      %587 = vmatpush1.msra.mxu0 0.0
      %588 = vmatprep.subr.mxu0 0.0
      %589 = vmatpush1.msra.mxu0 0.0
      %590 = vmatprep.subr.mxu0 0.0
      %591 = vmatpush1.msra.mxu0 0.0
      %592 = vmatprep.subr.mxu0 0.0
      %593 = vmatpush1.msra.mxu0 %v536
      %594 = vmatprep.subr.mxu0 0.0
      %595 = vmatpush1.msra.mxu0 %v535
      %596 = vmatprep.subr.mxu0 0.0
      %597 = vmatpush1.msra.mxu0 %v534
      %598 = vmatprep.subr.mxu0 0.0
      %599 = vmatpush1.msra.mxu0 %v533
      %600 = vmatprep.subr.mxu0 0.0
      %601 = vmatpush1.msra.mxu0 %v532
      %602 = vmatprep.subr.mxu0 0.0
      %603 = vmatpush1.msra.mxu0 %v531
      %604 = vmatprep.subr.mxu0 0.0
      %605 = vmatpush1.msra.mxu0 %v530
      %606 = vmatprep.subr.mxu0 0.0
      %607 = vmatpush2.msra.mxu0 0.0
      %608 = vmatprep.subr.mxu0 0.0
      %609 = vmatpush2.msra.mxu0 0.0
      %610 = vmatprep.subr.mxu0 0.0
      %611 = vmatpush2.msra.mxu0 0.0
      %612 = vmatprep.subr.mxu0 0.0
      %613 = vmatpush2.msra.mxu0 0.0
      %614 = vmatprep.subr.mxu0 0.0
      %615 = vmatpush2.msra.mxu0 0.0
      %616 = vmatprep.subr.mxu0 0.0
      %617 = vmatpush2.msra.mxu0 0.0
      %618 = vmatprep.subr.mxu0 0.0
      %619 = vmatpush2.msra.mxu0 0.0
      %620 = vmatprep.subr.mxu0 0.0
      %621 = vmatpush2.msra.mxu0 0.0
      %622 = vmatprep.subr.mxu0 0.0
      %623 = vmatpush2.msra.mxu0 0.0
      %624 = vmatprep.subr.mxu0 0.0
      %625 = vmatpush2.msra.mxu0 0.0
      %626 = vmatprep.subr.mxu0 0.0
      %627 = vmatpush2.msra.mxu0 0.0
      %628 = vmatprep.subr.mxu0 0.0
      %629 = vmatpush2.msra.mxu0 0.0
      %630 = vmatprep.subr.mxu0 0.0
      %631 = vmatpush2.msra.mxu0 0.0
      %632 = vmatprep.subr.mxu0 0.0
      %633 = vmatpush2.msra.mxu0 0.0
      %634 = vmatprep.subr.mxu0 0.0
      %635 = vmatpush2.msra.mxu0 0.0
      %636 = vmatprep.subr.mxu0 0.0
      %637 = vmatpush2.msra.mxu0 0.0
      %638 = vmatprep.mubr.f32.mxu0 0.0
      %639 = vmatmul.mubr.f32.gmra.mxu0 %v563
      %v640 = vpop.f32.mrf.mxu0
      %v641 = vadd.f32 %v544, %v640
      %v642 = vpop.f32.mrf.mxu0
      %643 = vmatprep.mubr.f32.mxu0 0.0
      %644 = vmatmul.mubr.f32.gmra.mxu0 %v566
      %v645 = vpop.f32.mrf.mxu0
      %v646 = vadd.f32 %v549, %v645
      %v647 = vpop.f32.mrf.mxu0
      %648 = vmatprep.mubr.f32.mxu0 0.0
      %649 = vmatmul.mubr.f32.gmra.mxu0 %v569
      %v650 = vpop.f32.mrf.mxu0
      %v651 = vadd.f32 %v554, %v650
      %v652 = vpop.f32.mrf.mxu0
      %653 = vmatprep.mubr.f32.mxu0 0.0
      %654 = vmatmul.mubr.f32.gmra.mxu0 %v572
      %v655 = vpop.f32.mrf.mxu0
      %v656 = vadd.f32 %v559, %v655
      %v657 = vpop.f32.mrf.mxu0
      %658 = vdwg.mxu0
      %v659 = vmax.f32 %v641, 0.0
      %v660 = vmax.f32 %v646, 0.0
      %v661 = vmax.f32 %v651, 0.0
      %v662 = vmax.f32 %v656, 0.0
      %663 = vst.msk [vmem:[%s308] sm:$0xff] %vm316, %v659
      %664 = vst.msk [vmem:[%s308 + $0x8] sm:$0xff] %vm316, %v660
      %665 = vst.msk [vmem:[%s308 + $0x10] sm:$0xff] %vm316, %v661
      %666 = vst.msk [vmem:[%s308 + $0x18] sm:$0xff] %vm316, %v662
      %p667 = scmp.lt.s32.totalorder %s20, 1
      %s668 = scalar_select %p667, %s20, 1
      %p669 = scmp.lt.s32.totalorder %s21, 0
      %s670 = scalar_select %p669, %s21, 0
      %s671 = smul.addr %s668, 4
      %s672 = sadd.s32 %s670, %s671
      %s673 = smul.addr %s672, 8
      %s674 = scalar_lea.vmem %s5, %s673
      // Predicated region
      $region41: #{tpu_custom_call.1} parent=39 // pred_check
        %p675 = pneg %p174
      $region42: #{tpu_custom_call.1} parent=39 // pred_check_branch
        %677 = sbr.rel (%p675) target = $region44
      $region43: #{tpu_custom_call.1} parent=39 // pred_region
        _
      $region44: #{tpu_custom_call.1} parent=39 // pred_fallthru
        _
    $region40: #{tpu_custom_call.1} parent=5 // pred_fallthru
      _
    %p678 = scmp.le.s32.totalorder 2, %s11
    // Predicated region
    $region45: #{tpu_custom_call.1} parent=5 // pred_check
      %p679 = pneg %p678
    $region46: #{tpu_custom_call.1} parent=5 // pred_check_branch
      %681 = sbr.rel (%p679) target = $region48
    $region47: #{tpu_custom_call.1} parent=5 // pred_region
      %s682 = ssub.s32 %s11, 2
      // Predicated region
      $region49: #{tpu_custom_call.1} parent=47 // pred_check
        %p683 = pneg %p180
      $region50: #{tpu_custom_call.1} parent=47 // pred_check_branch
        %685 = sbr.rel (%p683) target = $region52
      $region51: #{tpu_custom_call.1} parent=47 // pred_region
        %p686 = scmp.lt.s32.totalorder %s22, 1
        %s687 = scalar_select %p686, %s22, 1
        %p688 = scmp.lt.s32.totalorder %s23, 0
        %s689 = scalar_select %p688, %s23, 0
        %s690 = smul.addr %s687, 4
        %s691 = sadd.s32 %s689, %s690
        %s692 = smul.addr %s691, 8
        %s693 = scalar_lea.vmem %s5, %s692
      $region52: #{tpu_custom_call.1} parent=47 // pred_fallthru
        _
    $region48: #{tpu_custom_call.1} parent=5 // pred_fallthru
      _
  $region6: #{tpu_custom_call.1} parent=0 // loop_footer
    %s15 = sadd.s32 1, %s11
  $region7: #{tpu_custom_call.1} parent=0 // loop_footer_branch
    %10 = sbr.rel target = $region3
  $region8: #{tpu_custom_call.1} parent=0 // loop_exit
    _

</llo_original>
